<compile_context>
chip_gen: v5e
topology: v5e:2x2
jax: 0.10.0
libtpu: 0.0.40
codegen_flags: <defaults>
</compile_context>

<pallas_src>
import functools
import math

import jax
import jax.numpy as jnp
from jax.experimental import pallas as pl
from jax.experimental.pallas import tpu as pltpu


_TILE_B_MAX = 512  # per-step overhead dominates this tiny MLP; big tiles win


def _round_up(x, m):
    return ((x + m - 1) // m) * m


def _cdiv(a, b):
    return -(-a // b)


def _device_kind():
    try:
        return jax.devices()[0].device_kind.lower()
    except Exception:
        return ""


def _has_bf16_vpu():
    # Enable packed-bf16 ReLU only where the VPU has bf16 VALU (v6e / v7x).
    kind = _device_kind()
    return any(tag in kind for tag in ("v6", "v7", "6e", "7x"))


def _tensorcores_per_chip():
    # v7x has 2 TensorCores per chip; v5e/v6e have 1.
    kind = _device_kind()
    if "v7" in kind or "7x" in kind:
        return 2
    return 1


def _critic_kernel(x_ref, w1_ref, b1_ref, w2_ref, b2_ref, w3_ref, b3_ref,
                   o_ref, *, bf16_relu):
    bf16 = jnp.bfloat16
    x = x_ref[...].astype(bf16)

    # Layer 1: Linear + ReLU.  bf16 operands on the MXU, f32 accumulation.
    h1 = jnp.dot(x, w1_ref[...], preferred_element_type=jnp.float32) + b1_ref[...]
    if bf16_relu:
        h1 = jnp.maximum(h1.astype(bf16), 0)       # packed bf16 VPU (v6e/v7x)
    else:
        h1 = jnp.maximum(h1, 0.0).astype(bf16)     # f32 VPU (v5e)

    # Layer 2: Linear + ReLU.
    h2 = jnp.dot(h1, w2_ref[...], preferred_element_type=jnp.float32) + b2_ref[...]
    if bf16_relu:
        h2 = jnp.maximum(h2.astype(bf16), 0)
    else:
        h2 = jnp.maximum(h2, 0.0).astype(bf16)

    # Head: Linear (no activation).
    o_ref[...] = (jnp.dot(h2, w3_ref[...], preferred_element_type=jnp.float32)
                  + b3_ref[...]).astype(o_ref.dtype)


def _full_spec(shape):
    # Whole-array block, same block for every grid step (weights / biases).
    return pl.BlockSpec(shape, lambda *_: (0,) * len(shape))


def critic_forward(state, action, params):
    """Pallas implementation of Critic.forward(state, action)."""
    w1, b1, w2, b2, w3, b3 = params

    B, S = state.shape
    A = action.shape[1]
    K = S + A
    H1 = w1.shape[1]          # padded hidden (512)
    H2 = w2.shape[1]          # padded hidden (384)
    out_dim = w3.shape[1]

    # ---- Batch tiling ----------------------------------------------------
    # Padding bounded to <8 rows per tile; >=2 (even) tiles on v7x so both
    # TensorCores run; tile count minimized otherwise (grid-step overhead).
    B8 = _round_up(B, 8)
    n_tiles = _cdiv(B8, _TILE_B_MAX)
    ncores = _tensorcores_per_chip()
    if ncores >= 2 and B8 >= 16:
        n_tiles = max(n_tiles, ncores)
        n_tiles = _round_up(n_tiles, ncores)
    tile_b = _round_up(_cdiv(B8, n_tiles), 8)
    B_pad = tile_b * n_tiles

    x = jnp.concatenate([state, action], axis=1)   # (B, S+A), K is tiny (20)
    if B_pad != B:
        x = jnp.pad(x, ((0, B_pad - B), (0, 0)))
    grid = (n_tiles,)

    flops = 2 * B_pad * (K * H1 + H1 * H2 + H2 * out_dim)
    bytes_accessed = (x.nbytes + w1.nbytes + b1.nbytes + w2.nbytes + b2.nbytes
                      + w3.nbytes + b3.nbytes + B_pad * out_dim * 4)

    kernel = functools.partial(_critic_kernel, bf16_relu=_has_bf16_vpu())

    out = pl.pallas_call(
        kernel,
        out_shape=jax.ShapeDtypeStruct((B_pad, out_dim), jnp.float32),
        grid=grid,
        in_specs=[
            pl.BlockSpec((tile_b, K), lambda i: (i, 0)),
            _full_spec(w1.shape), _full_spec(b1.shape),
            _full_spec(w2.shape), _full_spec(b2.shape),
            _full_spec(w3.shape), _full_spec(b3.shape),
        ],
        out_specs=pl.BlockSpec((tile_b, out_dim), lambda i: (i, 0)),
        compiler_params=pltpu.CompilerParams(
            dimension_semantics=("parallel",)),
        cost_estimate=pl.CostEstimate(
            flops=flops, transcendentals=0, bytes_accessed=bytes_accessed),
    )(x, w1, b1, w2, b2, w3, b3)

    return out[:B] if B_pad != B else out


def init_critic_params(key, state_size, action_size):
    """Deterministic init mirroring the PyTorch module's __init__.

    - linear1/linear2 weights: fanin_init -> U(-1/sqrt(fan_in), 1/sqrt(fan_in))
    - head weight: U(-3e-3, 3e-3)
    - all biases: PyTorch nn.Linear default U(-1/sqrt(fan_in), 1/sqrt(fan_in))
      (the module only overrides the head *weight*).
    Weights are stored (in, out), bf16, with hidden dims zero-padded to lane
    multiples (400->512, 300->384).  Biases stay f32 (also zero-padded).
    """
    sizes = [state_size + action_size, 400, 300, action_size]
    H1, H2 = 400, 300
    H1p, H2p = 512, 384  # lane-aligned storage
    keys = jax.random.split(key, 6)

    def uniform(k, shape, bound):
        return jax.random.uniform(k, shape, jnp.float32, -bound, bound)

    f1 = 1.0 / math.sqrt(sizes[0])
    f2 = 1.0 / math.sqrt(sizes[1])
    f3 = 1.0 / math.sqrt(sizes[2])

    w1 = uniform(keys[0], (sizes[0], H1), f1)
    b1 = uniform(keys[1], (1, H1), f1)
    w2 = uniform(keys[2], (H1, H2), f2)
    b2 = uniform(keys[3], (1, H2), f2)
    w3 = uniform(keys[4], (H2, sizes[3]), 3e-3)
    b3 = uniform(keys[5], (1, sizes[3]), f3)

    # Zero-pad the hidden dims; padded lanes stay exactly zero end-to-end.
    w1 = jnp.pad(w1, ((0, 0), (0, H1p - H1)))
    b1 = jnp.pad(b1, ((0, 0), (0, H1p - H1)))
    w2 = jnp.pad(w2, ((0, H1p - H1), (0, H2p - H2)))
    b2 = jnp.pad(b2, ((0, 0), (0, H2p - H2)))
    w3 = jnp.pad(w3, ((0, H2p - H2), (0, 0)))

    bf16 = jnp.bfloat16
    return (w1.astype(bf16), b1, w2.astype(bf16), b2, w3.astype(bf16), b3)


def critic_reference(state, action, params):
    """Pure-JAX reference with identical dtypes (bf16 weights, f32 accum)."""
    w1, b1, w2, b2, w3, b3 = params
    bf16 = jnp.bfloat16
    x = jnp.concatenate([state, action], axis=1).astype(bf16)
    h1 = jnp.dot(x, w1, preferred_element_type=jnp.float32) + b1
    h1 = jnp.maximum(h1, 0.0).astype(bf16)
    h2 = jnp.dot(h1, w2, preferred_element_type=jnp.float32) + b2
    h2 = jnp.maximum(h2, 0.0).astype(bf16)
    return jnp.dot(h2, w3, preferred_element_type=jnp.float32) + b3


if __name__ == "__main__":
    key = jax.random.PRNGKey(0)
    k_param, k_state, k_action = jax.random.split(key, 3)

    batch, state_size, action_size = 8, 16, 4

    params = init_critic_params(k_param, state_size, action_size)
    state = jax.random.normal(k_state, (batch, state_size), jnp.float32)
    action = jax.random.normal(k_action, (batch, action_size), jnp.float32)

    out = critic_forward(state, action, params)
    out = jax.block_until_ready(out)

    ref = critic_reference(state, action, params)
    assert out.shape == (batch, action_size)
    assert jnp.allclose(out, ref, atol=1e-3, rtol=1e-3)

    print("KERNEL_OK")
</pallas_src>

<mosaic_0001>
module attributes {stable_mosaic.version = 11 : i64} {
  func.func @_critic_kernel(%arg0: i32, %arg1: memref<8x20xf32, #tpu.memory_space<vmem>>, %arg2: memref<20x512xbf16, #tpu.memory_space<vmem>>, %arg3: memref<1x512xf32, #tpu.memory_space<vmem>>, %arg4: memref<512x384xbf16, #tpu.memory_space<vmem>>, %arg5: memref<1x384xf32, #tpu.memory_space<vmem>>, %arg6: memref<384x4xbf16, #tpu.memory_space<vmem>>, %arg7: memref<1x4xf32, #tpu.memory_space<vmem>>, %arg8: memref<8x4xf32, #tpu.memory_space<vmem>>) attributes {dimension_semantics = [#tpu.dimension_semantics<parallel>], iteration_bounds = array<i64: 1>, scalar_prefetch = 0 : i64, scratch_operands = 0 : i64, tpu.core_type = #tpu.core_type<tc>, window_params = [{transform_indices = @transform_0, window_bounds = array<i64: 8, 20>}, {pipeline_mode = #tpu.pipeline_mode<synchronous>, transform_indices = @transform_1, window_bounds = array<i64: 20, 512>}, {pipeline_mode = #tpu.pipeline_mode<synchronous>, transform_indices = @transform_2, window_bounds = array<i64: 1, 512>}, {pipeline_mode = #tpu.pipeline_mode<synchronous>, transform_indices = @transform_3, window_bounds = array<i64: 512, 384>}, {pipeline_mode = #tpu.pipeline_mode<synchronous>, transform_indices = @transform_4, window_bounds = array<i64: 1, 384>}, {pipeline_mode = #tpu.pipeline_mode<synchronous>, transform_indices = @transform_5, window_bounds = array<i64: 384, 4>}, {pipeline_mode = #tpu.pipeline_mode<synchronous>, transform_indices = @transform_6, window_bounds = array<i64: 1, 4>}, {transform_indices = @transform_7, window_bounds = array<i64: 8, 4>}]} {
    %c0 = arith.constant 0 : index
    %c0_0 = arith.constant 0 : index
    %0 = vector.load %arg1[%c0, %c0_0] : memref<8x20xf32, #tpu.memory_space<vmem>>, vector<8x20xf32>
    %1 = arith.truncf %0 : vector<8x20xf32> to vector<8x20xbf16>
    %c0_1 = arith.constant 0 : index
    %c0_2 = arith.constant 0 : index
    %2 = vector.load %arg2[%c0_1, %c0_2] : memref<20x512xbf16, #tpu.memory_space<vmem>>, vector<20x512xbf16>
    %cst = arith.constant dense<0.000000e+00> : vector<8x512xf32>
    %3 = tpu.matmul %1, %2, %cst {dimension_numbers = #tpu.dot_dimension_numbers<[1], [0], [0], [1], [0, 0, 1, 1], [], []>} : vector<8x20xbf16>, vector<20x512xbf16>, vector<8x512xf32> -> vector<8x512xf32>
    %c0_3 = arith.constant 0 : index
    %c0_4 = arith.constant 0 : index
    %4 = vector.load %arg3[%c0_3, %c0_4] : memref<1x512xf32, #tpu.memory_space<vmem>>, vector<1x512xf32>
    %5 = vector.broadcast %4 : vector<1x512xf32> to vector<8x512xf32>
    %6 = arith.addf %3, %5 : vector<8x512xf32>
    %cst_5 = arith.constant 0.000000e+00 : f32
    %7 = vector.broadcast %cst_5 : f32 to vector<8x512xf32>
    %8 = arith.maximumf %6, %7 : vector<8x512xf32>
    %9 = arith.truncf %8 : vector<8x512xf32> to vector<8x512xbf16>
    %c0_6 = arith.constant 0 : index
    %c0_7 = arith.constant 0 : index
    %10 = vector.load %arg4[%c0_6, %c0_7] : memref<512x384xbf16, #tpu.memory_space<vmem>>, vector<512x384xbf16>
    %cst_8 = arith.constant dense<0.000000e+00> : vector<8x384xf32>
    %11 = tpu.matmul %9, %10, %cst_8 {dimension_numbers = #tpu.dot_dimension_numbers<[1], [0], [0], [1], [0, 0, 1, 1], [], []>} : vector<8x512xbf16>, vector<512x384xbf16>, vector<8x384xf32> -> vector<8x384xf32>
    %c0_9 = arith.constant 0 : index
    %c0_10 = arith.constant 0 : index
    %12 = vector.load %arg5[%c0_9, %c0_10] : memref<1x384xf32, #tpu.memory_space<vmem>>, vector<1x384xf32>
    %13 = vector.broadcast %12 : vector<1x384xf32> to vector<8x384xf32>
    %14 = arith.addf %11, %13 : vector<8x384xf32>
    %cst_11 = arith.constant 0.000000e+00 : f32
    %15 = vector.broadcast %cst_11 : f32 to vector<8x384xf32>
    %16 = arith.maximumf %14, %15 : vector<8x384xf32>
    %17 = arith.truncf %16 : vector<8x384xf32> to vector<8x384xbf16>
    %c0_12 = arith.constant 0 : index
    %c0_13 = arith.constant 0 : index
    %18 = vector.load %arg6[%c0_12, %c0_13] : memref<384x4xbf16, #tpu.memory_space<vmem>>, vector<384x4xbf16>
    %cst_14 = arith.constant dense<0.000000e+00> : vector<8x4xf32>
    %19 = tpu.matmul %17, %18, %cst_14 {dimension_numbers = #tpu.dot_dimension_numbers<[1], [0], [0], [1], [0, 0, 1, 1], [], []>} : vector<8x384xbf16>, vector<384x4xbf16>, vector<8x4xf32> -> vector<8x4xf32>
    %c0_15 = arith.constant 0 : index
    %c0_16 = arith.constant 0 : index
    %20 = vector.load %arg7[%c0_15, %c0_16] : memref<1x4xf32, #tpu.memory_space<vmem>>, vector<1x4xf32>
    %21 = vector.broadcast %20 : vector<1x4xf32> to vector<8x4xf32>
    %22 = arith.addf %19, %21 : vector<8x4xf32>
    %c0_17 = arith.constant 0 : index
    %c0_18 = arith.constant 0 : index
    %23 = vector.load %arg8[%c0_17, %c0_18] : memref<8x4xf32, #tpu.memory_space<vmem>>, vector<8x4xf32>
    tpu.vector_store %arg8[%c0_17, %c0_18], %22 {strides = array<i32>} : memref<8x4xf32, #tpu.memory_space<vmem>>, vector<8x4xf32>,
    return
  }
  func.func @transform_0(%arg0: i32) -> (i32, i32) {
    %c0_i32 = arith.constant 0 : i32
    %c0_i32_0 = arith.constant 0 : i32
    return %arg0, %c0_i32 : i32, i32
  }
  func.func @transform_1(%arg0: i32) -> (i32, i32) {
    %c0_i32 = arith.constant 0 : i32
    %c0_i32_0 = arith.constant 0 : i32
    %c0_i32_1 = arith.constant 0 : i32
    return %c0_i32, %c0_i32_0 : i32, i32
  }
  func.func @transform_2(%arg0: i32) -> (i32, i32) {
    %c0_i32 = arith.constant 0 : i32
    %c0_i32_0 = arith.constant 0 : i32
    %c0_i32_1 = arith.constant 0 : i32
    return %c0_i32, %c0_i32_0 : i32, i32
  }
  func.func @transform_3(%arg0: i32) -> (i32, i32) {
    %c0_i32 = arith.constant 0 : i32
    %c0_i32_0 = arith.constant 0 : i32
    %c0_i32_1 = arith.constant 0 : i32
    return %c0_i32, %c0_i32_0 : i32, i32
  }
  func.func @transform_4(%arg0: i32) -> (i32, i32) {
    %c0_i32 = arith.constant 0 : i32
    %c0_i32_0 = arith.constant 0 : i32
    %c0_i32_1 = arith.constant 0 : i32
    return %c0_i32, %c0_i32_0 : i32, i32
  }
  func.func @transform_5(%arg0: i32) -> (i32, i32) {
    %c0_i32 = arith.constant 0 : i32
    %c0_i32_0 = arith.constant 0 : i32
    %c0_i32_1 = arith.constant 0 : i32
    return %c0_i32, %c0_i32_0 : i32, i32
  }
  func.func @transform_6(%arg0: i32) -> (i32, i32) {
    %c0_i32 = arith.constant 0 : i32
    %c0_i32_0 = arith.constant 0 : i32
    %c0_i32_1 = arith.constant 0 : i32
    return %c0_i32, %c0_i32_0 : i32, i32
  }
  func.func @transform_7(%arg0: i32) -> (i32, i32) {
    %c0_i32 = arith.constant 0 : i32
    %c0_i32_0 = arith.constant 0 : i32
    return %arg0, %c0_i32 : i32, i32
  }
}

</mosaic_0001>

<llo_original>
// kernel: tpu_custom_call.1
$region0: #{tpu_custom_call.1}
  #allocation0 [shape = 'u32[]', space=smem, size = 0x4, offset = 0x4, fixed_abs, tag = 'smem constant byte address 0x4 - core index']
  #allocation1 [shape = 'u32[72,128]{1,0:T(1,128)}', space=vmem, size = 0x9000, scoped, tag = 'internal scratch']
  %s0 = inlined_call_operand.vmem [shape: f32[8,20], index: 0, kind: input, shape index: {}]
  %s1 = inlined_call_operand.vmem [shape: bf16[20,512], index: 1, kind: input, shape index: {}]
  %s2 = inlined_call_operand.vmem [shape: f32[1,512], index: 2, kind: input, shape index: {}]
  %s3 = inlined_call_operand.hbm [shape: bf16[512,384], index: 3, kind: input, shape index: {}]
  %s4 = inlined_call_operand.vmem [shape: f32[1,384], index: 4, kind: input, shape index: {}]
  %s5 = inlined_call_operand.vmem [shape: bf16[384,4], index: 5, kind: input, shape index: {}]
  %s6 = inlined_call_operand.vmem [shape: f32[1,4], index: 6, kind: input, shape index: {}]
  %s7 = inlined_call_operand.vmem [shape: f32[8,4], index: 7, kind: output, shape index: {}]
  %s8 = sld [smem:[#allocation0]]
  $region42: #{tpu_custom_call.1} parent=0
    _
  %s10 = ssub.s32 1, %s8
  %s11 = scalar_select 0, %s10, %s8
  $region1: #{tpu_custom_call.1} parent=0
    #allocation2 [shape = 'u8[393216]{0}', space=vmem, size = 0x60000, scoped, tag = 'input window, operand 3, single buffered']
    #allocation3 [shape = 's32[1]{0}', space=sflag, size = 0x4, scoped, tag = 'scoped memory for tpu_custom_call.1']
    %12 = vsyncpa [#allocation3], 0
    // Predicated region
    $region2: #{tpu_custom_call.1} parent=1 // pred_check
      _
    $region3: #{tpu_custom_call.1} parent=1 // pred_check_branch
      %14 = sbr.rel (0) target = $region5
    $region4: #{tpu_custom_call.1} parent=1 // pred_region
      _
    $region5: #{tpu_custom_call.1} parent=1 // pred_fallthru
      _
    // Predicated region
    $region6: #{tpu_custom_call.1} parent=1 // pred_check
      _
    $region7: #{tpu_custom_call.1} parent=1 // pred_check_branch
      %16 = sbr.rel (0) target = $region9
    $region8: #{tpu_custom_call.1} parent=1 // pred_region
      _
    $region9: #{tpu_custom_call.1} parent=1 // pred_fallthru
      _
    // Predicated region
    $region10: #{tpu_custom_call.1} parent=1 // pred_check
      _
    $region11: #{tpu_custom_call.1} parent=1 // pred_check_branch
      %18 = sbr.rel (0) target = $region13
    $region12: #{tpu_custom_call.1} parent=1 // pred_region
      _
    $region13: #{tpu_custom_call.1} parent=1 // pred_fallthru
      _
    // Predicated region
    $region14: #{tpu_custom_call.1} parent=1 // pred_check
      _
    $region15: #{tpu_custom_call.1} parent=1 // pred_check_branch
      %20 = sbr.rel (0) target = $region17
    $region16: #{tpu_custom_call.1} parent=1 // pred_region
      %22 = vsyncadd [#allocation3], 0
      %s23 = sshll.u32 %s3, 4
      %s24 = int_to_ptr.hbm [resolvable:$true] %s23
      %s25 = sshll.u32 [#allocation2], 4
      %s26 = int_to_ptr.vmem [resolvable:$true] %s25
      %31 = dma.hbm_to_vmem [thread:$0]  %s24, 12288, %s26, [#allocation3], 192, 192, 12
    $region17: #{tpu_custom_call.1} parent=1 // pred_fallthru
      _
    // Predicated region
    $region18: #{tpu_custom_call.1} parent=1 // pred_check
      _
    $region19: #{tpu_custom_call.1} parent=1 // pred_check_branch
      %33 = sbr.rel (0) target = $region21
    $region20: #{tpu_custom_call.1} parent=1 // pred_region
      _
    $region21: #{tpu_custom_call.1} parent=1 // pred_fallthru
      _
    // Predicated region
    $region22: #{tpu_custom_call.1} parent=1 // pred_check
      _
    $region23: #{tpu_custom_call.1} parent=1 // pred_check_branch
      %35 = sbr.rel (0) target = $region25
    $region24: #{tpu_custom_call.1} parent=1 // pred_region
      _
    $region25: #{tpu_custom_call.1} parent=1 // pred_fallthru
      _
    // Predicated region
    $region26: #{tpu_custom_call.1} parent=1 // pred_check
      _
    $region27: #{tpu_custom_call.1} parent=1 // pred_check_branch
      %37 = sbr.rel (0) target = $region29
    $region28: #{tpu_custom_call.1} parent=1 // pred_region
      _
    $region29: #{tpu_custom_call.1} parent=1 // pred_fallthru
      _
    // Predicated region
    $region30: #{tpu_custom_call.1} parent=1 // pred_check
      _
    $region31: #{tpu_custom_call.1} parent=1 // pred_check_branch
      %39 = sbr.rel (0) target = $region33
    $region32: #{tpu_custom_call.1} parent=1 // pred_region
      %41 = dma.done [#allocation3], 12288
    $region33: #{tpu_custom_call.1} parent=1 // pred_fallthru
      _
    %v43 = vld [vmem:[%s0] sm:$0xff]
    %v44 = vpack.c.bf16 %v43, %v43
    %v45 = vld [vmem:[%s1] sm:$0xff]
    %v46 = vld [vmem:[%s1 + $0x8] sm:$0xff]
    %v47 = vld [vmem:[%s1 + $0x10] sm:$0xff]
    %v48 = vld [vmem:[%s1 + $0x18] sm:$0xff]
    %v49 = vld [vmem:[%s1 + $0x20] sm:$0x33]
    %v50 = vld [vmem:[%s1 + $0x28] sm:$0x33]
    %v51 = vld [vmem:[%s2] sm:$0xf]
    %v53 = vperm.slane %v51, 0
    %v54 = vperm.slane %v51, 1
    %v55 = vperm.slane %v51, 2
    %v56 = vperm.slane %v51, 3
    %v67 = vunpack.c.l.b16 %v45
    %v68 = vunpack.c.h.b16 %v45
    %v69 = vunpack.c.l.b16 %v46
    %v70 = vunpack.c.h.b16 %v46
    %v71 = vunpack.c.l.b16 %v47
    %v72 = vunpack.c.h.b16 %v47
    %v73 = vunpack.c.l.b16 %v48
    %v74 = vunpack.c.h.b16 %v48
    %v75 = vunpack.c.l.b16 %v49
    %v76 = vunpack.c.h.b16 %v49
    %v77 = vunpack.c.l.b16 %v50
    %v78 = vunpack.c.h.b16 %v50
    %v79 = vpack.c.b16 %v71, %v67
    %v80 = vpack.c.b16 %v72, %v68
    %v81 = vpack.c.b16 %v73, %v69
    %v82 = vpack.c.b16 %v74, %v70
    %v83 = vpack.c.b16 %v75, %v75
    %v84 = vpack.c.b16 %v76, %v76
    %v85 = vpack.c.b16 %v77, %v77
    %v86 = vpack.c.b16 %v78, %v78
    %vm91 = vcmask 162816
    %v93 = vsel %vm91, %v44, 0
    %vm95 = vcmask 1041408
    %v97 = vsel %vm95, %v83, 0
    %v100 = vsel %vm95, %v84, 0
    %v103 = vsel %vm95, %v85, 0
    %v106 = vsel %vm95, %v86, 0
    %108 = vmatpush.bf16.msra.mxu0 0
    %109 = vmatpush.bf16.msra.mxu0 0
    %110 = vmatpush.bf16.msra.mxu0 0
    %111 = vmatpush.bf16.msra.mxu0 0
    %112 = vmatpush.bf16.msra.mxu0 0
    %113 = vmatpush.bf16.msra.mxu0 0
    %114 = vmatpush.bf16.msra.mxu0 %v97
    %115 = vmatpush.bf16.msra.mxu0 %v79
    %116 = vmatmul.bf16.gmra.mxu0 %v93
    %v117 = vpop.f32.mrf.mxu0
    %v118 = vadd.f32 %v53, %v117
    %v119 = vpop.f32.mrf.mxu0
    %120 = vdwg.mxu0
    %121 = vmatpush.bf16.msra.mxu0 0
    %122 = vmatpush.bf16.msra.mxu0 0
    %123 = vmatpush.bf16.msra.mxu0 0
    %124 = vmatpush.bf16.msra.mxu0 0
    %125 = vmatpush.bf16.msra.mxu0 0
    %126 = vmatpush.bf16.msra.mxu0 0
    %127 = vmatpush.bf16.msra.mxu0 %v100
    %128 = vmatpush.bf16.msra.mxu0 %v80
    %129 = vmatmul.bf16.gmra.mxu0 %v93
    %v130 = vpop.f32.mrf.mxu0
    %v131 = vadd.f32 %v54, %v130
    %v132 = vpop.f32.mrf.mxu0
    %133 = vdwg.mxu0
    %134 = vmatpush.bf16.msra.mxu0 0
    %135 = vmatpush.bf16.msra.mxu0 0
    %136 = vmatpush.bf16.msra.mxu0 0
    %137 = vmatpush.bf16.msra.mxu0 0
    %138 = vmatpush.bf16.msra.mxu0 0
    %139 = vmatpush.bf16.msra.mxu0 0
    %140 = vmatpush.bf16.msra.mxu0 %v103
    %141 = vmatpush.bf16.msra.mxu0 %v81
    %142 = vmatmul.bf16.gmra.mxu0 %v93
    %v143 = vpop.f32.mrf.mxu0
    %v144 = vadd.f32 %v55, %v143
    %v145 = vpop.f32.mrf.mxu0
    %146 = vdwg.mxu0
    %147 = vmatpush.bf16.msra.mxu0 0
    %148 = vmatpush.bf16.msra.mxu0 0
    %149 = vmatpush.bf16.msra.mxu0 0
    %150 = vmatpush.bf16.msra.mxu0 0
    %151 = vmatpush.bf16.msra.mxu0 0
    %152 = vmatpush.bf16.msra.mxu0 0
    %153 = vmatpush.bf16.msra.mxu0 %v106
    %154 = vmatpush.bf16.msra.mxu0 %v82
    %155 = vmatmul.bf16.gmra.mxu0 %v93
    %v156 = vpop.f32.mrf.mxu0
    %v157 = vadd.f32 %v56, %v156
    %v158 = vpop.f32.mrf.mxu0
    %159 = vdwg.mxu0
    %v160 = vmax.f32 %v118, 0.0
    %v161 = vmax.f32 %v131, 0.0
    %v162 = vmax.f32 %v144, 0.0
    %v163 = vmax.f32 %v157, 0.0
    %v164 = vpack.c.bf16 %v160, %v160
    %v165 = vpack.c.bf16 %v161, %v161
    %v166 = vpack.c.bf16 %v162, %v162
    %v167 = vpack.c.bf16 %v163, %v163
    %v168 = vld [vmem:[#allocation2] sm:$0xff]
    %v169 = vld [vmem:[#allocation2 + $0x8] sm:$0xf]
    %v170 = vld [vmem:[#allocation2 + $0xc] sm:$0xff]
    %v171 = vld [vmem:[#allocation2 + $0x14] sm:$0xf]
    %v172 = vld [vmem:[#allocation2 + $0x18] sm:$0xff]
    %v173 = vld [vmem:[#allocation2 + $0x20] sm:$0xf]
    %v174 = vld [vmem:[#allocation2 + $0x24] sm:$0xff]
    %v175 = vld [vmem:[#allocation2 + $0x2c] sm:$0xf]
    %v176 = vld [vmem:[#allocation2 + $0x30] sm:$0xff]
    %v177 = vld [vmem:[#allocation2 + $0x38] sm:$0xf]
    %v178 = vld [vmem:[#allocation2 + $0x3c] sm:$0xff]
    %v179 = vld [vmem:[#allocation2 + $0x44] sm:$0xf]
    %v180 = vld [vmem:[#allocation2 + $0x48] sm:$0xff]
    %v181 = vld [vmem:[#allocation2 + $0x50] sm:$0xf]
    %v182 = vld [vmem:[#allocation2 + $0x54] sm:$0xff]
    %v183 = vld [vmem:[#allocation2 + $0x5c] sm:$0xf]
    %v184 = vld [vmem:[#allocation2 + $0x60] sm:$0xff]
    %v185 = vld [vmem:[#allocation2 + $0x68] sm:$0xf]
    %v186 = vld [vmem:[#allocation2 + $0x6c] sm:$0xff]
    %v187 = vld [vmem:[#allocation2 + $0x74] sm:$0xf]
    %v188 = vld [vmem:[#allocation2 + $0x78] sm:$0xff]
    %v189 = vld [vmem:[#allocation2 + $0x80] sm:$0xf]
    %v190 = vld [vmem:[#allocation2 + $0x84] sm:$0xff]
    %v191 = vld [vmem:[#allocation2 + $0x8c] sm:$0xf]
    %v192 = vld [vmem:[#allocation2 + $0x90] sm:$0xff]
    %v193 = vld [vmem:[#allocation2 + $0x98] sm:$0xf]
    %v194 = vld [vmem:[#allocation2 + $0x9c] sm:$0xff]
    %v195 = vld [vmem:[#allocation2 + $0xa4] sm:$0xf]
    %v196 = vld [vmem:[#allocation2 + $0xa8] sm:$0xff]
    %v197 = vld [vmem:[#allocation2 + $0xb0] sm:$0xf]
    %v198 = vld [vmem:[#allocation2 + $0xb4] sm:$0xff]
    %v199 = vld [vmem:[#allocation2 + $0xbc] sm:$0xf]
    %v200 = vld [vmem:[#allocation2 + $0xc0] sm:$0xff]
    %v201 = vld [vmem:[#allocation2 + $0xc8] sm:$0xf]
    %v202 = vld [vmem:[#allocation2 + $0xcc] sm:$0xff]
    %v203 = vld [vmem:[#allocation2 + $0xd4] sm:$0xf]
    %v204 = vld [vmem:[#allocation2 + $0xd8] sm:$0xff]
    %v205 = vld [vmem:[#allocation2 + $0xe0] sm:$0xf]
    %v206 = vld [vmem:[#allocation2 + $0xe4] sm:$0xff]
    %v207 = vld [vmem:[#allocation2 + $0xec] sm:$0xf]
    %v208 = vld [vmem:[#allocation2 + $0xf0] sm:$0xff]
    %v209 = vld [vmem:[#allocation2 + $0xf8] sm:$0xf]
    %v210 = vld [vmem:[#allocation2 + $0xfc] sm:$0xff]
    %v211 = vld [vmem:[#allocation2 + $0x104] sm:$0xf]
    %v212 = vld [vmem:[#allocation2 + $0x108] sm:$0xff]
    %v213 = vld [vmem:[#allocation2 + $0x110] sm:$0xf]
    %v214 = vld [vmem:[#allocation2 + $0x114] sm:$0xff]
    %v215 = vld [vmem:[#allocation2 + $0x11c] sm:$0xf]
    %v216 = vld [vmem:[#allocation2 + $0x120] sm:$0xff]
    %v217 = vld [vmem:[#allocation2 + $0x128] sm:$0xf]
    %v218 = vld [vmem:[#allocation2 + $0x12c] sm:$0xff]
    %v219 = vld [vmem:[#allocation2 + $0x134] sm:$0xf]
    %v220 = vld [vmem:[#allocation2 + $0x138] sm:$0xff]
    %v221 = vld [vmem:[#allocation2 + $0x140] sm:$0xf]
    %v222 = vld [vmem:[#allocation2 + $0x144] sm:$0xff]
    %v223 = vld [vmem:[#allocation2 + $0x14c] sm:$0xf]
    %v224 = vld [vmem:[#allocation2 + $0x150] sm:$0xff]
    %v225 = vld [vmem:[#allocation2 + $0x158] sm:$0xf]
    %v226 = vld [vmem:[#allocation2 + $0x15c] sm:$0xff]
    %v227 = vld [vmem:[#allocation2 + $0x164] sm:$0xf]
    %v228 = vld [vmem:[#allocation2 + $0x168] sm:$0xff]
    %v229 = vld [vmem:[#allocation2 + $0x170] sm:$0xf]
    %v230 = vld [vmem:[#allocation2 + $0x174] sm:$0xff]
    %v231 = vld [vmem:[#allocation2 + $0x17c] sm:$0xf]
    %v232 = vld [vmem:[#allocation2 + $0x180] sm:$0xff]
    %v233 = vld [vmem:[#allocation2 + $0x188] sm:$0xf]
    %v234 = vld [vmem:[#allocation2 + $0x18c] sm:$0xff]
    %v235 = vld [vmem:[#allocation2 + $0x194] sm:$0xf]
    %v236 = vld [vmem:[#allocation2 + $0x198] sm:$0xff]
    %v237 = vld [vmem:[#allocation2 + $0x1a0] sm:$0xf]
    %v238 = vld [vmem:[#allocation2 + $0x1a4] sm:$0xff]
    %v239 = vld [vmem:[#allocation2 + $0x1ac] sm:$0xf]
    %v240 = vld [vmem:[#allocation2 + $0x1b0] sm:$0xff]
    %v241 = vld [vmem:[#allocation2 + $0x1b8] sm:$0xf]
    %v242 = vld [vmem:[#allocation2 + $0x1bc] sm:$0xff]
    %v243 = vld [vmem:[#allocation2 + $0x1c4] sm:$0xf]
    %v244 = vld [vmem:[#allocation2 + $0x1c8] sm:$0xff]
    %v245 = vld [vmem:[#allocation2 + $0x1d0] sm:$0xf]
    %v246 = vld [vmem:[#allocation2 + $0x1d4] sm:$0xff]
    %v247 = vld [vmem:[#allocation2 + $0x1dc] sm:$0xf]
    %v248 = vld [vmem:[#allocation2 + $0x1e0] sm:$0xff]
    %v249 = vld [vmem:[#allocation2 + $0x1e8] sm:$0xf]
    %v250 = vld [vmem:[#allocation2 + $0x1ec] sm:$0xff]
    %v251 = vld [vmem:[#allocation2 + $0x1f4] sm:$0xf]
    %v252 = vld [vmem:[#allocation2 + $0x1f8] sm:$0xff]
    %v253 = vld [vmem:[#allocation2 + $0x200] sm:$0xf]
    %v254 = vld [vmem:[#allocation2 + $0x204] sm:$0xff]
    %v255 = vld [vmem:[#allocation2 + $0x20c] sm:$0xf]
    %v256 = vld [vmem:[#allocation2 + $0x210] sm:$0xff]
    %v257 = vld [vmem:[#allocation2 + $0x218] sm:$0xf]
    %v258 = vld [vmem:[#allocation2 + $0x21c] sm:$0xff]
    %v259 = vld [vmem:[#allocation2 + $0x224] sm:$0xf]
    %v260 = vld [vmem:[#allocation2 + $0x228] sm:$0xff]
    %v261 = vld [vmem:[#allocation2 + $0x230] sm:$0xf]
    %v262 = vld [vmem:[#allocation2 + $0x234] sm:$0xff]
    %v263 = vld [vmem:[#allocation2 + $0x23c] sm:$0xf]
    %v264 = vld [vmem:[#allocation2 + $0x240] sm:$0xff]
    %v265 = vld [vmem:[#allocation2 + $0x248] sm:$0xf]
    %v266 = vld [vmem:[#allocation2 + $0x24c] sm:$0xff]
    %v267 = vld [vmem:[#allocation2 + $0x254] sm:$0xf]
    %v268 = vld [vmem:[#allocation2 + $0x258] sm:$0xff]
    %v269 = vld [vmem:[#allocation2 + $0x260] sm:$0xf]
    %v270 = vld [vmem:[#allocation2 + $0x264] sm:$0xff]
    %v271 = vld [vmem:[#allocation2 + $0x26c] sm:$0xf]
    %v272 = vld [vmem:[#allocation2 + $0x270] sm:$0xff]
    %v273 = vld [vmem:[#allocation2 + $0x278] sm:$0xf]
    %v274 = vld [vmem:[#allocation2 + $0x27c] sm:$0xff]
    %v275 = vld [vmem:[#allocation2 + $0x284] sm:$0xf]
    %v276 = vld [vmem:[#allocation2 + $0x288] sm:$0xff]
    %v277 = vld [vmem:[#allocation2 + $0x290] sm:$0xf]
    %v278 = vld [vmem:[#allocation2 + $0x294] sm:$0xff]
    %v279 = vld [vmem:[#allocation2 + $0x29c] sm:$0xf]
    %v280 = vld [vmem:[#allocation2 + $0x2a0] sm:$0xff]
    %v281 = vld [vmem:[#allocation2 + $0x2a8] sm:$0xf]
    %v282 = vld [vmem:[#allocation2 + $0x2ac] sm:$0xff]
    %v283 = vld [vmem:[#allocation2 + $0x2b4] sm:$0xf]
    %v284 = vld [vmem:[#allocation2 + $0x2b8] sm:$0xff]
    %v285 = vld [vmem:[#allocation2 + $0x2c0] sm:$0xf]
    %v286 = vld [vmem:[#allocation2 + $0x2c4] sm:$0xff]
    %v287 = vld [vmem:[#allocation2 + $0x2cc] sm:$0xf]
    %v288 = vld [vmem:[#allocation2 + $0x2d0] sm:$0xff]
    %v289 = vld [vmem:[#allocation2 + $0x2d8] sm:$0xf]
    %v290 = vld [vmem:[#allocation2 + $0x2dc] sm:$0xff]
    %v291 = vld [vmem:[#allocation2 + $0x2e4] sm:$0xf]
    %v292 = vld [vmem:[#allocation2 + $0x2e8] sm:$0xff]
    %v293 = vld [vmem:[#allocation2 + $0x2f0] sm:$0xf]
    %v294 = vld [vmem:[#allocation2 + $0x2f4] sm:$0xff]
    %v295 = vld [vmem:[#allocation2 + $0x2fc] sm:$0xf]
    %v296 = vld [vmem:[%s4] sm:$0x7]
    %v298 = vperm.slane %v296, 0
    %v299 = vperm.slane %v296, 1
    %v300 = vperm.slane %v296, 2
    %v432 = vunpack.c.l.b16 %v168
    %v433 = vunpack.c.h.b16 %v168
    %v434 = vunpack.c.l.b16 %v169
    %v435 = vunpack.c.l.b16 %v170
    %v436 = vunpack.c.h.b16 %v170
    %v437 = vunpack.c.l.b16 %v171
    %v438 = vunpack.c.l.b16 %v172
    %v439 = vunpack.c.h.b16 %v172
    %v440 = vunpack.c.l.b16 %v173
    %v441 = vunpack.c.l.b16 %v174
    %v442 = vunpack.c.h.b16 %v174
    %v443 = vunpack.c.l.b16 %v175
    %v444 = vunpack.c.l.b16 %v176
    %v445 = vunpack.c.h.b16 %v176
    %v446 = vunpack.c.l.b16 %v177
    %v447 = vunpack.c.l.b16 %v178
    %v448 = vunpack.c.h.b16 %v178
    %v449 = vunpack.c.l.b16 %v179
    %v450 = vunpack.c.l.b16 %v180
    %v451 = vunpack.c.h.b16 %v180
    %v452 = vunpack.c.l.b16 %v181
    %v453 = vunpack.c.l.b16 %v182
    %v454 = vunpack.c.h.b16 %v182
    %v455 = vunpack.c.l.b16 %v183
    %v456 = vunpack.c.l.b16 %v184
    %v457 = vunpack.c.h.b16 %v184
    %v458 = vunpack.c.l.b16 %v185
    %v459 = vunpack.c.l.b16 %v186
    %v460 = vunpack.c.h.b16 %v186
    %v461 = vunpack.c.l.b16 %v187
    %v462 = vunpack.c.l.b16 %v188
    %v463 = vunpack.c.h.b16 %v188
    %v464 = vunpack.c.l.b16 %v189
    %v465 = vunpack.c.l.b16 %v190
    %v466 = vunpack.c.h.b16 %v190
    %v467 = vunpack.c.l.b16 %v191
    %v468 = vunpack.c.l.b16 %v192
    %v469 = vunpack.c.h.b16 %v192
    %v470 = vunpack.c.l.b16 %v193
    %v471 = vunpack.c.l.b16 %v194
    %v472 = vunpack.c.h.b16 %v194
    %v473 = vunpack.c.l.b16 %v195
    %v474 = vunpack.c.l.b16 %v196
    %v475 = vunpack.c.h.b16 %v196
    %v476 = vunpack.c.l.b16 %v197
    %v477 = vunpack.c.l.b16 %v198
    %v478 = vunpack.c.h.b16 %v198
    %v479 = vunpack.c.l.b16 %v199
    %v480 = vunpack.c.l.b16 %v200
    %v481 = vunpack.c.h.b16 %v200
    %v482 = vunpack.c.l.b16 %v201
    %v483 = vunpack.c.l.b16 %v202
    %v484 = vunpack.c.h.b16 %v202
    %v485 = vunpack.c.l.b16 %v203
    %v486 = vunpack.c.l.b16 %v204
    %v487 = vunpack.c.h.b16 %v204
    %v488 = vunpack.c.l.b16 %v205
    %v489 = vunpack.c.l.b16 %v206
    %v490 = vunpack.c.h.b16 %v206
    %v491 = vunpack.c.l.b16 %v207
    %v492 = vunpack.c.l.b16 %v208
    %v493 = vunpack.c.h.b16 %v208
    %v494 = vunpack.c.l.b16 %v209
    %v495 = vunpack.c.l.b16 %v210
    %v496 = vunpack.c.h.b16 %v210
    %v497 = vunpack.c.l.b16 %v211
    %v498 = vunpack.c.l.b16 %v212
    %v499 = vunpack.c.h.b16 %v212
    %v500 = vunpack.c.l.b16 %v213
    %v501 = vunpack.c.l.b16 %v214
    %v502 = vunpack.c.h.b16 %v214
    %v503 = vunpack.c.l.b16 %v215
    %v504 = vunpack.c.l.b16 %v216
    %v505 = vunpack.c.h.b16 %v216
    %v506 = vunpack.c.l.b16 %v217
    %v507 = vunpack.c.l.b16 %v218
    %v508 = vunpack.c.h.b16 %v218
    %v509 = vunpack.c.l.b16 %v219
    %v510 = vunpack.c.l.b16 %v220
    %v511 = vunpack.c.h.b16 %v220
    %v512 = vunpack.c.l.b16 %v221
    %v513 = vunpack.c.l.b16 %v222
    %v514 = vunpack.c.h.b16 %v222
    %v515 = vunpack.c.l.b16 %v223
    %v516 = vunpack.c.l.b16 %v224
    %v517 = vunpack.c.h.b16 %v224
    %v518 = vunpack.c.l.b16 %v225
    %v519 = vunpack.c.l.b16 %v226
    %v520 = vunpack.c.h.b16 %v226
    %v521 = vunpack.c.l.b16 %v227
    %v522 = vunpack.c.l.b16 %v228
    %v523 = vunpack.c.h.b16 %v228
    %v524 = vunpack.c.l.b16 %v229
    %v525 = vunpack.c.l.b16 %v230
    %v526 = vunpack.c.h.b16 %v230
    %v527 = vunpack.c.l.b16 %v231
    %v528 = vunpack.c.l.b16 %v232
    %v529 = vunpack.c.h.b16 %v232
    %v530 = vunpack.c.l.b16 %v233
    %v531 = vunpack.c.l.b16 %v234
    %v532 = vunpack.c.h.b16 %v234
    %v533 = vunpack.c.l.b16 %v235
    %v534 = vunpack.c.l.b16 %v236
    %v535 = vunpack.c.h.b16 %v236
    %v536 = vunpack.c.l.b16 %v237
    %v537 = vunpack.c.l.b16 %v238
    %v538 = vunpack.c.h.b16 %v238
    %v539 = vunpack.c.l.b16 %v239
    %v540 = vunpack.c.l.b16 %v240
    %v541 = vunpack.c.h.b16 %v240
    %v542 = vunpack.c.l.b16 %v241
    %v543 = vunpack.c.l.b16 %v242
    %v544 = vunpack.c.h.b16 %v242
    %v545 = vunpack.c.l.b16 %v243
    %v546 = vunpack.c.l.b16 %v244
    %v547 = vunpack.c.h.b16 %v244
    %v548 = vunpack.c.l.b16 %v245
    %v549 = vunpack.c.l.b16 %v246
    %v550 = vunpack.c.h.b16 %v246
    %v551 = vunpack.c.l.b16 %v247
    %v552 = vunpack.c.l.b16 %v248
    %v553 = vunpack.c.h.b16 %v248
    %v554 = vunpack.c.l.b16 %v249
    %v555 = vunpack.c.l.b16 %v250
    %v556 = vunpack.c.h.b16 %v250
    %v557 = vunpack.c.l.b16 %v251
    %v558 = vunpack.c.l.b16 %v252
    %v559 = vunpack.c.h.b16 %v252
    %v560 = vunpack.c.l.b16 %v253
    %v561 = vunpack.c.l.b16 %v254
    %v562 = vunpack.c.h.b16 %v254
    %v563 = vunpack.c.l.b16 %v255
    %v564 = vunpack.c.l.b16 %v256
    %v565 = vunpack.c.h.b16 %v256
    %v566 = vunpack.c.l.b16 %v257
    %v567 = vunpack.c.l.b16 %v258
    %v568 = vunpack.c.h.b16 %v258
    %v569 = vunpack.c.l.b16 %v259
    %v570 = vunpack.c.l.b16 %v260
    %v571 = vunpack.c.h.b16 %v260
    %v572 = vunpack.c.l.b16 %v261
    %v573 = vunpack.c.l.b16 %v262
    %v574 = vunpack.c.h.b16 %v262
    %v575 = vunpack.c.l.b16 %v263
    %v576 = vunpack.c.l.b16 %v264
    %v577 = vunpack.c.h.b16 %v264
    %v578 = vunpack.c.l.b16 %v265
    %v579 = vunpack.c.l.b16 %v266
    %v580 = vunpack.c.h.b16 %v266
    %v581 = vunpack.c.l.b16 %v267
    %v582 = vunpack.c.l.b16 %v268
    %v583 = vunpack.c.h.b16 %v268
    %v584 = vunpack.c.l.b16 %v269
    %v585 = vunpack.c.l.b16 %v270
    %v586 = vunpack.c.h.b16 %v270
    %v587 = vunpack.c.l.b16 %v271
    %v588 = vunpack.c.l.b16 %v272
    %v589 = vunpack.c.h.b16 %v272
    %v590 = vunpack.c.l.b16 %v273
    %v591 = vunpack.c.l.b16 %v274
    %v592 = vunpack.c.h.b16 %v274
    %v593 = vunpack.c.l.b16 %v275
    %v594 = vunpack.c.l.b16 %v276
    %v595 = vunpack.c.h.b16 %v276
    %v596 = vunpack.c.l.b16 %v277
    %v597 = vunpack.c.l.b16 %v278
    %v598 = vunpack.c.h.b16 %v278
    %v599 = vunpack.c.l.b16 %v279
    %v600 = vunpack.c.l.b16 %v280
    %v601 = vunpack.c.h.b16 %v280
    %v602 = vunpack.c.l.b16 %v281
    %v603 = vunpack.c.l.b16 %v282
    %v604 = vunpack.c.h.b16 %v282
    %v605 = vunpack.c.l.b16 %v283
    %v606 = vunpack.c.l.b16 %v284
    %v607 = vunpack.c.h.b16 %v284
    %v608 = vunpack.c.l.b16 %v285
    %v609 = vunpack.c.l.b16 %v286
    %v610 = vunpack.c.h.b16 %v286
    %v611 = vunpack.c.l.b16 %v287
    %v612 = vunpack.c.l.b16 %v288
    %v613 = vunpack.c.h.b16 %v288
    %v614 = vunpack.c.l.b16 %v289
    %v615 = vunpack.c.l.b16 %v290
    %v616 = vunpack.c.h.b16 %v290
    %v617 = vunpack.c.l.b16 %v291
    %v618 = vunpack.c.l.b16 %v292
    %v619 = vunpack.c.h.b16 %v292
    %v620 = vunpack.c.l.b16 %v293
    %v621 = vunpack.c.l.b16 %v294
    %v622 = vunpack.c.h.b16 %v294
    %v623 = vunpack.c.l.b16 %v295
    %v624 = vpack.c.b16 %v435, %v432
    %v625 = vpack.c.b16 %v436, %v433
    %v626 = vpack.c.b16 %v437, %v434
    %v627 = vpack.c.b16 %v441, %v438
    %v628 = vpack.c.b16 %v442, %v439
    %v629 = vpack.c.b16 %v443, %v440
    %v630 = vpack.c.b16 %v447, %v444
    %v631 = vpack.c.b16 %v448, %v445
    %v632 = vpack.c.b16 %v449, %v446
    %v633 = vpack.c.b16 %v453, %v450
    %v634 = vpack.c.b16 %v454, %v451
    %v635 = vpack.c.b16 %v455, %v452
    %v636 = vpack.c.b16 %v459, %v456
    %v637 = vpack.c.b16 %v460, %v457
    %v638 = vpack.c.b16 %v461, %v458
    %v639 = vpack.c.b16 %v465, %v462
    %v640 = vpack.c.b16 %v466, %v463
    %v641 = vpack.c.b16 %v467, %v464
    %v642 = vpack.c.b16 %v471, %v468
    %v643 = vpack.c.b16 %v472, %v469
    %v644 = vpack.c.b16 %v473, %v470
    %v645 = vpack.c.b16 %v477, %v474
    %v646 = vpack.c.b16 %v478, %v475
    %v647 = vpack.c.b16 %v479, %v476
    %v648 = vpack.c.b16 %v483, %v480
    %v649 = vpack.c.b16 %v484, %v481
    %v650 = vpack.c.b16 %v485, %v482
    %v651 = vpack.c.b16 %v489, %v486
    %v652 = vpack.c.b16 %v490, %v487
    %v653 = vpack.c.b16 %v491, %v488
    %v654 = vpack.c.b16 %v495, %v492
    %v655 = vpack.c.b16 %v496, %v493
    %v656 = vpack.c.b16 %v497, %v494
    %v657 = vpack.c.b16 %v501, %v498
    %v658 = vpack.c.b16 %v502, %v499
    %v659 = vpack.c.b16 %v503, %v500
    %v660 = vpack.c.b16 %v507, %v504
    %v661 = vpack.c.b16 %v508, %v505
    %v662 = vpack.c.b16 %v509, %v506
    %v663 = vpack.c.b16 %v513, %v510
    %v664 = vpack.c.b16 %v514, %v511
    %v665 = vpack.c.b16 %v515, %v512
    %v666 = vpack.c.b16 %v519, %v516
    %v667 = vpack.c.b16 %v520, %v517
    %v668 = vpack.c.b16 %v521, %v518
    %v669 = vpack.c.b16 %v525, %v522
    %v670 = vpack.c.b16 %v526, %v523
    %v671 = vpack.c.b16 %v527, %v524
    %v672 = vpack.c.b16 %v531, %v528
    %v673 = vpack.c.b16 %v532, %v529
    %v674 = vpack.c.b16 %v533, %v530
    %v675 = vpack.c.b16 %v537, %v534
    %v676 = vpack.c.b16 %v538, %v535
    %v677 = vpack.c.b16 %v539, %v536
    %v678 = vpack.c.b16 %v543, %v540
    %v679 = vpack.c.b16 %v544, %v541
    %v680 = vpack.c.b16 %v545, %v542
    %v681 = vpack.c.b16 %v549, %v546
    %v682 = vpack.c.b16 %v550, %v547
    %v683 = vpack.c.b16 %v551, %v548
    %v684 = vpack.c.b16 %v555, %v552
    %v685 = vpack.c.b16 %v556, %v553
    %v686 = vpack.c.b16 %v557, %v554
    %v687 = vpack.c.b16 %v561, %v558
    %v688 = vpack.c.b16 %v562, %v559
    %v689 = vpack.c.b16 %v563, %v560
    %v690 = vpack.c.b16 %v567, %v564
    %v691 = vpack.c.b16 %v568, %v565
    %v692 = vpack.c.b16 %v569, %v566
    %v693 = vpack.c.b16 %v573, %v570
    %v694 = vpack.c.b16 %v574, %v571
    %v695 = vpack.c.b16 %v575, %v572
    %v696 = vpack.c.b16 %v579, %v576
    %v697 = vpack.c.b16 %v580, %v577
    %v698 = vpack.c.b16 %v581, %v578
    %v699 = vpack.c.b16 %v585, %v582
    %v700 = vpack.c.b16 %v586, %v583
    %v701 = vpack.c.b16 %v587, %v584
    %v702 = vpack.c.b16 %v591, %v588
    %v703 = vpack.c.b16 %v592, %v589
    %v704 = vpack.c.b16 %v593, %v590
    %v705 = vpack.c.b16 %v597, %v594
    %v706 = vpack.c.b16 %v598, %v595
    %v707 = vpack.c.b16 %v599, %v596
    %v708 = vpack.c.b16 %v603, %v600
    %v709 = vpack.c.b16 %v604, %v601
    %v710 = vpack.c.b16 %v605, %v602
    %v711 = vpack.c.b16 %v609, %v606
    %v712 = vpack.c.b16 %v610, %v607
    %v713 = vpack.c.b16 %v611, %v608
    %v714 = vpack.c.b16 %v615, %v612
    %v715 = vpack.c.b16 %v616, %v613
    %v716 = vpack.c.b16 %v617, %v614
    %v717 = vpack.c.b16 %v621, %v618
    %v718 = vpack.c.b16 %v622, %v619
    %v719 = vpack.c.b16 %v623, %v620
    %816 = vmatpush.bf16.msra.mxu0 %v645
    %817 = vmatpush.bf16.msra.mxu0 %v642
    %818 = vmatpush.bf16.msra.mxu0 %v639
    %819 = vmatpush.bf16.msra.mxu0 %v636
    %820 = vmatpush.bf16.msra.mxu0 %v633
    %821 = vmatpush.bf16.msra.mxu0 %v630
    %822 = vmatpush.bf16.msra.mxu0 %v627
    %823 = vmatpush.bf16.msra.mxu0 %v624
    %824 = vmatmul.bf16.gmra.mxu0 %v164
    %v825 = vpop.f32.mrf.mxu0
    %v826 = vadd.f32 %v298, %v825
    %v827 = vpop.f32.mrf.mxu0
    %828 = vdwg.mxu0
    %829 = vmatpush.bf16.msra.mxu0 %v669
    %830 = vmatpush.bf16.msra.mxu0 %v666
    %831 = vmatpush.bf16.msra.mxu0 %v663
    %832 = vmatpush.bf16.msra.mxu0 %v660
    %833 = vmatpush.bf16.msra.mxu0 %v657
    %834 = vmatpush.bf16.msra.mxu0 %v654
    %835 = vmatpush.bf16.msra.mxu0 %v651
    %836 = vmatpush.bf16.msra.mxu0 %v648
    %837 = vmatmul.bf16.gmra.mxu0 %v165
    %v838 = vpop.f32.mrf.mxu0
    %v839 = vadd.f32 %v826, %v838
    %v840 = vpop.f32.mrf.mxu0
    %841 = vdwg.mxu0
    %842 = vmatpush.bf16.msra.mxu0 %v693
    %843 = vmatpush.bf16.msra.mxu0 %v690
    %844 = vmatpush.bf16.msra.mxu0 %v687
    %845 = vmatpush.bf16.msra.mxu0 %v684
    %846 = vmatpush.bf16.msra.mxu0 %v681
    %847 = vmatpush.bf16.msra.mxu0 %v678
    %848 = vmatpush.bf16.msra.mxu0 %v675
    %849 = vmatpush.bf16.msra.mxu0 %v672
    %850 = vmatmul.bf16.gmra.mxu0 %v166
    %v851 = vpop.f32.mrf.mxu0
    %v852 = vadd.f32 %v839, %v851
    %v853 = vpop.f32.mrf.mxu0
    %854 = vdwg.mxu0
    %855 = vmatpush.bf16.msra.mxu0 %v717
    %856 = vmatpush.bf16.msra.mxu0 %v714
    %857 = vmatpush.bf16.msra.mxu0 %v711
    %858 = vmatpush.bf16.msra.mxu0 %v708
    %859 = vmatpush.bf16.msra.mxu0 %v705
    %860 = vmatpush.bf16.msra.mxu0 %v702
    %861 = vmatpush.bf16.msra.mxu0 %v699
    %862 = vmatpush.bf16.msra.mxu0 %v696
    %863 = vmatmul.bf16.gmra.mxu0 %v167
    %v864 = vpop.f32.mrf.mxu0
    %v865 = vadd.f32 %v852, %v864
    %v866 = vpop.f32.mrf.mxu0
    %867 = vdwg.mxu0
    %868 = vmatpush.bf16.msra.mxu0 %v646
    %869 = vmatpush.bf16.msra.mxu0 %v643
    %870 = vmatpush.bf16.msra.mxu0 %v640
    %871 = vmatpush.bf16.msra.mxu0 %v637
    %872 = vmatpush.bf16.msra.mxu0 %v634
    %873 = vmatpush.bf16.msra.mxu0 %v631
    %874 = vmatpush.bf16.msra.mxu0 %v628
    %875 = vmatpush.bf16.msra.mxu0 %v625
    %876 = vmatmul.bf16.gmra.mxu0 %v164
    %v877 = vpop.f32.mrf.mxu0
    %v878 = vadd.f32 %v299, %v877
    %v879 = vpop.f32.mrf.mxu0
    %880 = vdwg.mxu0
    %881 = vmatpush.bf16.msra.mxu0 %v670
    %882 = vmatpush.bf16.msra.mxu0 %v667
    %883 = vmatpush.bf16.msra.mxu0 %v664
    %884 = vmatpush.bf16.msra.mxu0 %v661
    %885 = vmatpush.bf16.msra.mxu0 %v658
    %886 = vmatpush.bf16.msra.mxu0 %v655
    %887 = vmatpush.bf16.msra.mxu0 %v652
    %888 = vmatpush.bf16.msra.mxu0 %v649
    %889 = vmatmul.bf16.gmra.mxu0 %v165
    %v890 = vpop.f32.mrf.mxu0
    %v891 = vadd.f32 %v878, %v890
    %v892 = vpop.f32.mrf.mxu0
    %893 = vdwg.mxu0
    %894 = vmatpush.bf16.msra.mxu0 %v694
    %895 = vmatpush.bf16.msra.mxu0 %v691
    %896 = vmatpush.bf16.msra.mxu0 %v688
    %897 = vmatpush.bf16.msra.mxu0 %v685
    %898 = vmatpush.bf16.msra.mxu0 %v682
    %899 = vmatpush.bf16.msra.mxu0 %v679
    %900 = vmatpush.bf16.msra.mxu0 %v676
    %901 = vmatpush.bf16.msra.mxu0 %v673
    %902 = vmatmul.bf16.gmra.mxu0 %v166
    %v903 = vpop.f32.mrf.mxu0
    %v904 = vadd.f32 %v891, %v903
    %v905 = vpop.f32.mrf.mxu0
    %906 = vdwg.mxu0
    %907 = vmatpush.bf16.msra.mxu0 %v718
    %908 = vmatpush.bf16.msra.mxu0 %v715
    %909 = vmatpush.bf16.msra.mxu0 %v712
    %910 = vmatpush.bf16.msra.mxu0 %v709
    %911 = vmatpush.bf16.msra.mxu0 %v706
    %912 = vmatpush.bf16.msra.mxu0 %v703
    %913 = vmatpush.bf16.msra.mxu0 %v700
    %914 = vmatpush.bf16.msra.mxu0 %v697
    %915 = vmatmul.bf16.gmra.mxu0 %v167
    %v916 = vpop.f32.mrf.mxu0
    %v917 = vadd.f32 %v904, %v916
    %v918 = vpop.f32.mrf.mxu0
    %919 = vdwg.mxu0
    %920 = vmatpush.bf16.msra.mxu0 %v647
    %921 = vmatpush.bf16.msra.mxu0 %v644
    %922 = vmatpush.bf16.msra.mxu0 %v641
    %923 = vmatpush.bf16.msra.mxu0 %v638
    %924 = vmatpush.bf16.msra.mxu0 %v635
    %925 = vmatpush.bf16.msra.mxu0 %v632
    %926 = vmatpush.bf16.msra.mxu0 %v629
    %927 = vmatpush.bf16.msra.mxu0 %v626
    %928 = vmatmul.bf16.gmra.mxu0 %v164
    %v929 = vpop.f32.mrf.mxu0
    %v930 = vadd.f32 %v300, %v929
    %v931 = vpop.f32.mrf.mxu0
    %932 = vdwg.mxu0
    %933 = vmatpush.bf16.msra.mxu0 %v671
    %934 = vmatpush.bf16.msra.mxu0 %v668
    %935 = vmatpush.bf16.msra.mxu0 %v665
    %936 = vmatpush.bf16.msra.mxu0 %v662
    %937 = vmatpush.bf16.msra.mxu0 %v659
    %938 = vmatpush.bf16.msra.mxu0 %v656
    %939 = vmatpush.bf16.msra.mxu0 %v653
    %940 = vmatpush.bf16.msra.mxu0 %v650
    %941 = vmatmul.bf16.gmra.mxu0 %v165
    %v942 = vpop.f32.mrf.mxu0
    %v943 = vadd.f32 %v930, %v942
    %v944 = vpop.f32.mrf.mxu0
    %945 = vdwg.mxu0
    %946 = vmatpush.bf16.msra.mxu0 %v695
    %947 = vmatpush.bf16.msra.mxu0 %v692
    %948 = vmatpush.bf16.msra.mxu0 %v689
    %949 = vmatpush.bf16.msra.mxu0 %v686
    %950 = vmatpush.bf16.msra.mxu0 %v683
    %951 = vmatpush.bf16.msra.mxu0 %v680
    %952 = vmatpush.bf16.msra.mxu0 %v677
    %953 = vmatpush.bf16.msra.mxu0 %v674
    %954 = vmatmul.bf16.gmra.mxu0 %v166
    %v955 = vpop.f32.mrf.mxu0
    %v956 = vadd.f32 %v943, %v955
    %v957 = vpop.f32.mrf.mxu0
    %958 = vdwg.mxu0
    %959 = vmatpush.bf16.msra.mxu0 %v719
    %960 = vmatpush.bf16.msra.mxu0 %v716
    %961 = vmatpush.bf16.msra.mxu0 %v713
    %962 = vmatpush.bf16.msra.mxu0 %v710
    %963 = vmatpush.bf16.msra.mxu0 %v707
    %964 = vmatpush.bf16.msra.mxu0 %v704
    %965 = vmatpush.bf16.msra.mxu0 %v701
    %966 = vmatpush.bf16.msra.mxu0 %v698
    %967 = vmatmul.bf16.gmra.mxu0 %v167
    %v968 = vpop.f32.mrf.mxu0
    %v969 = vadd.f32 %v956, %v968
    %v970 = vpop.f32.mrf.mxu0
    %971 = vdwg.mxu0
    %v972 = vmax.f32 %v865, 0.0
    %v973 = vmax.f32 %v917, 0.0
    %v974 = vmax.f32 %v969, 0.0
    %v975 = vpack.c.bf16 %v972, %v972
    %v976 = vpack.c.bf16 %v973, %v973
    %v977 = vpack.c.bf16 %v974, %v974
    %v978 = vld [vmem:[%s5] sm:$0xf]
    %v979 = vld [vmem:[%s5 + $0x4] sm:$0xf]
    %v980 = vld [vmem:[%s5 + $0x8] sm:$0xf]
    %v981 = vld [vmem:[%s5 + $0xc] sm:$0xf]
    %v982 = vld [vmem:[%s5 + $0x10] sm:$0xf]
    %v983 = vld [vmem:[%s5 + $0x14] sm:$0xf]
    %v984 = vld [vmem:[%s5 + $0x18] sm:$0xf]
    %v985 = vld [vmem:[%s5 + $0x1c] sm:$0xf]
    %v986 = vld [vmem:[%s5 + $0x20] sm:$0xf]
    %v987 = vld [vmem:[%s5 + $0x24] sm:$0xf]
    %v988 = vld [vmem:[%s5 + $0x28] sm:$0xf]
    %v989 = vld [vmem:[%s5 + $0x2c] sm:$0xf]
    %v990 = vld [vmem:[%s5 + $0x30] sm:$0xf]
    %v991 = vld [vmem:[%s5 + $0x34] sm:$0xf]
    %v992 = vld [vmem:[%s5 + $0x38] sm:$0xf]
    %v993 = vld [vmem:[%s5 + $0x3c] sm:$0xf]
    %v994 = vld [vmem:[%s5 + $0x40] sm:$0xf]
    %v995 = vld [vmem:[%s5 + $0x44] sm:$0xf]
    %v996 = vld [vmem:[%s5 + $0x48] sm:$0xf]
    %v997 = vld [vmem:[%s5 + $0x4c] sm:$0xf]
    %v998 = vld [vmem:[%s5 + $0x50] sm:$0xf]
    %v999 = vld [vmem:[%s5 + $0x54] sm:$0xf]
    %v1000 = vld [vmem:[%s5 + $0x58] sm:$0xf]
    %v1001 = vld [vmem:[%s5 + $0x5c] sm:$0xf]
    %v1002 = vld [vmem:[%s5 + $0x60] sm:$0xf]
    %v1003 = vld [vmem:[%s5 + $0x64] sm:$0xf]
    %v1004 = vld [vmem:[%s5 + $0x68] sm:$0xf]
    %v1005 = vld [vmem:[%s5 + $0x6c] sm:$0xf]
    %v1006 = vld [vmem:[%s5 + $0x70] sm:$0xf]
    %v1007 = vld [vmem:[%s5 + $0x74] sm:$0xf]
    %v1008 = vld [vmem:[%s5 + $0x78] sm:$0xf]
    %v1009 = vld [vmem:[%s5 + $0x7c] sm:$0xf]
    %v1010 = vld [vmem:[%s5 + $0x80] sm:$0xf]
    %v1011 = vld [vmem:[%s5 + $0x84] sm:$0xf]
    %v1012 = vld [vmem:[%s5 + $0x88] sm:$0xf]
    %v1013 = vld [vmem:[%s5 + $0x8c] sm:$0xf]
    %v1014 = vld [vmem:[%s5 + $0x90] sm:$0xf]
    %v1015 = vld [vmem:[%s5 + $0x94] sm:$0xf]
    %v1016 = vld [vmem:[%s5 + $0x98] sm:$0xf]
    %v1017 = vld [vmem:[%s5 + $0x9c] sm:$0xf]
    %v1018 = vld [vmem:[%s5 + $0xa0] sm:$0xf]
    %v1019 = vld [vmem:[%s5 + $0xa4] sm:$0xf]
    %v1020 = vld [vmem:[%s5 + $0xa8] sm:$0xf]
    %v1021 = vld [vmem:[%s5 + $0xac] sm:$0xf]
    %v1022 = vld [vmem:[%s5 + $0xb0] sm:$0xf]
    %v1023 = vld [vmem:[%s5 + $0xb4] sm:$0xf]
    %v1024 = vld [vmem:[%s5 + $0xb8] sm:$0xf]
    %v1025 = vld [vmem:[%s5 + $0xbc] sm:$0xf]
    %v1026 = vld [vmem:[%s6] sm:$0x1]
    %v1028 = vperm.slane %v1026, 0
    %v1078 = vunpack.c.l.b16 %v978
    %v1079 = vunpack.c.l.b16 %v979
    %v1080 = vunpack.c.l.b16 %v980
    %v1081 = vunpack.c.l.b16 %v981
    %v1082 = vunpack.c.l.b16 %v982
    %v1083 = vunpack.c.l.b16 %v983
    %v1084 = vunpack.c.l.b16 %v984
    %v1085 = vunpack.c.l.b16 %v985
    %v1086 = vunpack.c.l.b16 %v986
    %v1087 = vunpack.c.l.b16 %v987
    %v1088 = vunpack.c.l.b16 %v988
    %v1089 = vunpack.c.l.b16 %v989
    %v1090 = vunpack.c.l.b16 %v990
    %v1091 = vunpack.c.l.b16 %v991
    %v1092 = vunpack.c.l.b16 %v992
    %v1093 = vunpack.c.l.b16 %v993
    %v1094 = vunpack.c.l.b16 %v994
    %v1095 = vunpack.c.l.b16 %v995
    %v1096 = vunpack.c.l.b16 %v996
    %v1097 = vunpack.c.l.b16 %v997
    %v1098 = vunpack.c.l.b16 %v998
    %v1099 = vunpack.c.l.b16 %v999
    %v1100 = vunpack.c.l.b16 %v1000
    %v1101 = vunpack.c.l.b16 %v1001
    %v1102 = vunpack.c.l.b16 %v1002
    %v1103 = vunpack.c.l.b16 %v1003
    %v1104 = vunpack.c.l.b16 %v1004
    %v1105 = vunpack.c.l.b16 %v1005
    %v1106 = vunpack.c.l.b16 %v1006
    %v1107 = vunpack.c.l.b16 %v1007
    %v1108 = vunpack.c.l.b16 %v1008
    %v1109 = vunpack.c.l.b16 %v1009
    %v1110 = vunpack.c.l.b16 %v1010
    %v1111 = vunpack.c.l.b16 %v1011
    %v1112 = vunpack.c.l.b16 %v1012
    %v1113 = vunpack.c.l.b16 %v1013
    %v1114 = vunpack.c.l.b16 %v1014
    %v1115 = vunpack.c.l.b16 %v1015
    %v1116 = vunpack.c.l.b16 %v1016
    %v1117 = vunpack.c.l.b16 %v1017
    %v1118 = vunpack.c.l.b16 %v1018
    %v1119 = vunpack.c.l.b16 %v1019
    %v1120 = vunpack.c.l.b16 %v1020
    %v1121 = vunpack.c.l.b16 %v1021
    %v1122 = vunpack.c.l.b16 %v1022
    %v1123 = vunpack.c.l.b16 %v1023
    %v1124 = vunpack.c.l.b16 %v1024
    %v1125 = vunpack.c.l.b16 %v1025
    %v1126 = vpack.c.b16 %v1079, %v1078
    %v1127 = vpack.c.b16 %v1081, %v1080
    %v1128 = vpack.c.b16 %v1083, %v1082
    %v1129 = vpack.c.b16 %v1085, %v1084
    %v1130 = vpack.c.b16 %v1087, %v1086
    %v1131 = vpack.c.b16 %v1089, %v1088
    %v1132 = vpack.c.b16 %v1091, %v1090
    %v1133 = vpack.c.b16 %v1093, %v1092
    %v1134 = vpack.c.b16 %v1095, %v1094
    %v1135 = vpack.c.b16 %v1097, %v1096
    %v1136 = vpack.c.b16 %v1099, %v1098
    %v1137 = vpack.c.b16 %v1101, %v1100
    %v1138 = vpack.c.b16 %v1103, %v1102
    %v1139 = vpack.c.b16 %v1105, %v1104
    %v1140 = vpack.c.b16 %v1107, %v1106
    %v1141 = vpack.c.b16 %v1109, %v1108
    %v1142 = vpack.c.b16 %v1111, %v1110
    %v1143 = vpack.c.b16 %v1113, %v1112
    %v1144 = vpack.c.b16 %v1115, %v1114
    %v1145 = vpack.c.b16 %v1117, %v1116
    %v1146 = vpack.c.b16 %v1119, %v1118
    %v1147 = vpack.c.b16 %v1121, %v1120
    %v1148 = vpack.c.b16 %v1123, %v1122
    %v1149 = vpack.c.b16 %v1125, %v1124
    %1174 = vmatpush.bf16.msra.mxu0 %v1133
    %1175 = vmatpush.bf16.msra.mxu0 %v1132
    %1176 = vmatpush.bf16.msra.mxu0 %v1131
    %1177 = vmatpush.bf16.msra.mxu0 %v1130
    %1178 = vmatpush.bf16.msra.mxu0 %v1129
    %1179 = vmatpush.bf16.msra.mxu0 %v1128
    %1180 = vmatpush.bf16.msra.mxu0 %v1127
    %1181 = vmatpush.bf16.msra.mxu0 %v1126
    %1182 = vmatmul.bf16.gmra.mxu0 %v975
    %v1183 = vpop.f32.mrf.mxu0
    %v1184 = vadd.f32 %v1028, %v1183
    %v1185 = vpop.f32.mrf.mxu0
    %1186 = vdwg.mxu0
    %1187 = vmatpush.bf16.msra.mxu0 %v1141
    %1188 = vmatpush.bf16.msra.mxu0 %v1140
    %1189 = vmatpush.bf16.msra.mxu0 %v1139
    %1190 = vmatpush.bf16.msra.mxu0 %v1138
    %1191 = vmatpush.bf16.msra.mxu0 %v1137
    %1192 = vmatpush.bf16.msra.mxu0 %v1136
    %1193 = vmatpush.bf16.msra.mxu0 %v1135
    %1194 = vmatpush.bf16.msra.mxu0 %v1134
    %1195 = vmatmul.bf16.gmra.mxu0 %v976
    %v1196 = vpop.f32.mrf.mxu0
    %v1197 = vadd.f32 %v1184, %v1196
    %v1198 = vpop.f32.mrf.mxu0
    %1199 = vdwg.mxu0
    %1200 = vmatpush.bf16.msra.mxu0 %v1149
    %1201 = vmatpush.bf16.msra.mxu0 %v1148
    %1202 = vmatpush.bf16.msra.mxu0 %v1147
    %1203 = vmatpush.bf16.msra.mxu0 %v1146
    %1204 = vmatpush.bf16.msra.mxu0 %v1145
    %1205 = vmatpush.bf16.msra.mxu0 %v1144
    %1206 = vmatpush.bf16.msra.mxu0 %v1143
    %1207 = vmatpush.bf16.msra.mxu0 %v1142
    %1208 = vmatmul.bf16.gmra.mxu0 %v977
    %v1209 = vpop.f32.mrf.mxu0
    %v1210 = vadd.f32 %v1197, %v1209
    %v1211 = vpop.f32.mrf.mxu0
    %1212 = vdwg.mxu0
    %vm1213 = vcmask 31744
    %1214 = vst.msk [vmem:[%s7] sm:$0xff] %vm1213, %v1210
    // Predicated region
    $region34: #{tpu_custom_call.1} parent=1 // pred_check
      _
    $region35: #{tpu_custom_call.1} parent=1 // pred_check_branch
      %1216 = sbr.rel (0) target = $region37
    $region36: #{tpu_custom_call.1} parent=1 // pred_region
      _
    $region37: #{tpu_custom_call.1} parent=1 // pred_fallthru
      _
    // Predicated region
    $region38: #{tpu_custom_call.1} parent=1 // pred_check
      _
    $region39: #{tpu_custom_call.1} parent=1 // pred_check_branch
      %1218 = sbr.rel (0) target = $region41
    $region40: #{tpu_custom_call.1} parent=1 // pred_region
      _
    $region41: #{tpu_custom_call.1} parent=1 // pred_fallthru
      _
    %1219 = vsyncpa [#allocation3], 1

</llo_original>
